<compile_context>
chip_gen: v5e
topology: v5e:2x2
jax: 0.10.0
libtpu: 0.0.40
codegen_flags: <defaults>
</compile_context>

<pallas_src>
import functools

import jax
import jax.numpy as jnp
from jax.experimental import pallas as pl
from jax.experimental.pallas import tpu as pltpu

_LANE = 128            # lane width (last-dim granularity)
_ROW_TILE_CAP = 2048   # per-step pipeline overhead is negligible well before this


def _round_up(x, m):
    return ((x + m - 1) // m) * m


# ---------------------------------------------------------------------------
# Kernels
# ---------------------------------------------------------------------------
def _node_apply_kernel(x_ref, w_ref, b_ref, o_ref, *, activation):
    """Fused matmul + bias + activation (contraction dim fits one block)."""
    xv = x_ref[...]
    wv = w_ref[...]
    if xv.dtype != wv.dtype:
        # In-kernel cast to the MXU streaming dtype (e.g. bf16): x stays f32 in
        # HBM; no extra wrapper-side cast pass over the whole array.
        xv = xv.astype(wv.dtype)
    h = jnp.dot(xv, wv, preferred_element_type=jnp.float32)
    h = h + b_ref[...]                       # (1, tile_o) broadcasts over rows (f32 epilogue)
    o_ref[...] = activation(h).astype(o_ref.dtype)


def _node_apply_kernel_acc(x_ref, w_ref, b_ref, o_ref, acc_ref, *, activation):
    """K-tiled variant: f32 VMEM accumulator, epilogue on the last K step."""
    k = pl.program_id(2)

    @pl.when(k == 0)
    def _():
        acc_ref[...] = jnp.zeros_like(acc_ref)

    xv = x_ref[...]
    wv = w_ref[...]
    if xv.dtype != wv.dtype:
        xv = xv.astype(wv.dtype)
    acc_ref[...] += jnp.dot(xv, wv, preferred_element_type=jnp.float32)

    @pl.when(k == pl.num_programs(2) - 1)
    def _():
        o_ref[...] = activation(acc_ref[...] + b_ref[...]).astype(o_ref.dtype)


# ---------------------------------------------------------------------------
# Capability probes / planning
# ---------------------------------------------------------------------------
def _probe_kernel(x_ref, o_ref):
    o_ref[...] = x_ref[...] + 1.0


@functools.lru_cache(maxsize=1)
def _single_buffer_ok():
    """Whether this JAX build accepts pl.Buffered(1) (single-buffer const blocks)."""
    try:
        fn = pl.pallas_call(
            _probe_kernel,
            out_shape=jax.ShapeDtypeStruct((8, _LANE), jnp.float32),
            grid=(2,),
            in_specs=[pl.BlockSpec((8, _LANE), lambda i: (0, 0),
                                   pipeline_mode=pl.Buffered(1))],
            out_specs=pl.BlockSpec((8, _LANE), lambda i: (0, 0)),
        )
        jax.block_until_ready(fn(jnp.zeros((8, _LANE), jnp.float32)))
        return True
    except Exception:      # pipeline_mode / Buffered(1) unsupported -> default 2 buffers
        return False


@functools.lru_cache(maxsize=1)
def _vmem_limit_bytes():
    """Generation-aware scoped-VMEM limit (v5e/v6e ~96 MiB, v7x ~48 MiB)."""
    try:
        cap = int(pltpu.get_tpu_info().vmem_capacity_bytes)
    except Exception:
        cap = 64 * 1024 * 1024             # v7x per-core VMEM: smallest across generations
    return min((cap * 3) // 4, 100 * 1024 * 1024)


def _plan_weight_tiles(in_feats, out_feats, w_itemsize, budget, pad_lanes, single_buffer):
    """Pick the kernel-visible output width and the resident weight chunk."""
    if out_feats % _LANE == 0 or pad_lanes:
        out_cols = _round_up(out_feats, _LANE)   # lane-dense (unmasked vst) stores
    else:
        # Exact narrow width: masked stores, but no pad / slice HBM passes.
        out_cols = out_feats

    tile_k, tile_o = in_feats, out_cols
    w_cap = budget // 3                          # weight(+bias) buffers: <= ~1/3 of the budget

    def w_bytes(tk, to, bufs):
        # Bias block (1, to) pads to 8 sublanes in VMEM.
        return bufs * (tk * to * w_itemsize + 8 * to * 4)

    if w_bytes(tile_k, tile_o, 1 if single_buffer else 2) > w_cap:
        # Tile the output columns (a *parallel* grid axis). 512 = 2x the 256-wide
        # v6e/v7x MXU; 128 granularity would only matter when tuning v5e alone.
        tile_o = 512
        out_cols = _round_up(out_feats, tile_o)
        if w_bytes(tile_k, tile_o, 2) > w_cap:
            # Also tile the contraction dim (adds an f32 accumulator + epilogue).
            tk = 512
            while tk > _LANE and in_feats % tk:
                tk //= 2
            if in_feats % tk == 0:
                tile_k = tk
            # else: in_feats has no 128-multiple divisor; keep K un-tiled and let
            # the row tile shrink instead.
    return tile_k, tile_o, out_cols


# ---------------------------------------------------------------------------
# Forward
# ---------------------------------------------------------------------------
@functools.partial(
    jax.jit,
    static_argnames=("activation", "out_dtype", "tile_k", "tile_o", "out_feats",
                     "keep_padded", "single_buffer", "vmem_limit", "budget"))
def _node_apply_fwd(x, w, b, *, activation, out_dtype, tile_k, tile_o, out_feats,
                    keep_padded, single_buffer, vmem_limit, budget):
    N, in_feats = x.shape
    out_cols = w.shape[1]

    n_k = pl.cdiv(in_feats, tile_k)
    n_o = pl.cdiv(out_cols, tile_o)
    const_w = (n_k == 1 and n_o == 1)
    w_bufs = 1 if (const_w and single_buffer) else 2

    x_bytes = jnp.dtype(x.dtype).itemsize
    w_itemsize = jnp.dtype(w.dtype).itemsize
    o_bytes = jnp.dtype(out_dtype).itemsize

    # Row tile: largest that fits the VMEM budget next to the resident weight
    # chunk (double-buffered x / out tiles + accumulator when K is tiled).
    fixed = w_bufs * (tile_k * tile_o * w_itemsize + 8 * tile_o * 4)
    per_row = 2 * tile_k * x_bytes + 2 * tile_o * o_bytes + (tile_o * 4 if n_k > 1 else 0)
    row_mult = max(8, 32 // min(x_bytes, o_bytes))           # 8 f32 / 16 bf16 / 32 int8 rows
    tile_n = max(row_mult, ((budget - fixed) // per_row) // row_mult * row_mult)
    tile_n = min(tile_n, _ROW_TILE_CAP, _round_up(N, row_mult))
    # v7x has 2 TensorCores: make sure the parallel grid has >= 2 steps.
    if n_o == 1 and tile_n >= N and N > row_mult:
        tile_n = _round_up(pl.cdiv(N, 2), row_mult)
    n_rows = pl.cdiv(N, tile_n)

    out_shape = jax.ShapeDtypeStruct((N, out_cols), out_dtype)

    if n_k == 1:
        kernel = functools.partial(_node_apply_kernel, activation=activation)
        grid = (n_rows, n_o)
        const_kw = {"pipeline_mode": pl.Buffered(1)} if (const_w and single_buffer) else {}
        in_specs = [
            # x streams in large row tiles.  (Only add pl.Buffered(3) here after
            # xprof shows exposed input DMA — and re-run the budget with 3 bufs.)
            pl.BlockSpec((tile_n, in_feats), lambda i, j: (i, 0)),
            # Constant-index weight / bias stay VMEM-resident across grid steps;
            # single-buffered when supported so they do not cost 2x VMEM.
            pl.BlockSpec((in_feats, tile_o), lambda i, j: (0, j), **const_kw),
            pl.BlockSpec((1, tile_o), lambda i, j: (0, j), **const_kw),
        ]
        out_spec = pl.BlockSpec((tile_n, tile_o), lambda i, j: (i, j))
        scratch = []
        dims = ("parallel", "parallel")
    else:
        kernel = functools.partial(_node_apply_kernel_acc, activation=activation)
        grid = (n_rows, n_o, n_k)                            # reduction axis last
        in_specs = [
            pl.BlockSpec((tile_n, tile_k), lambda i, j, k: (i, k)),
            pl.BlockSpec((tile_k, tile_o), lambda i, j, k: (k, j)),
            pl.BlockSpec((1, tile_o), lambda i, j, k: (0, j)),
        ]
        out_spec = pl.BlockSpec((tile_n, tile_o), lambda i, j, k: (i, j))
        scratch = [pltpu.VMEM((tile_n, tile_o), jnp.float32)]
        dims = ("parallel", "parallel", "arbitrary")

    out = pl.pallas_call(
        kernel,
        out_shape=out_shape,
        grid_spec=pltpu.PrefetchScalarGridSpec(
            num_scalar_prefetch=0,
            grid=grid,
            in_specs=in_specs,
            out_specs=out_spec,
            scratch_shapes=scratch,
        ),
        compiler_params=pltpu.CompilerParams(
            dimension_semantics=dims,
            vmem_limit_bytes=vmem_limit,
        ),
    )(x, w, b)

    if out_cols != out_feats and not keep_padded:
        # TODO(synk): let the downstream GCN aggregation consume the padded slab
        # (keep_padded=True) to avoid this extra HBM read+write of the result.
        out = out[:, :out_feats]
    return out


class NodeApplyModule:
    """Pallas-TPU port of the DGL/PyTorch NodeApplyModule: h -> act(h @ W.T + b).

    Parameter preparation (transpose to (in, out), lane padding, dtype cast) is
    done once at construction time, not on every forward call.
    """

    def __init__(self, W, b, *, activation=None, compute_dtype=None, out_dtype=None,
                 pad_output_lanes=False, keep_padded=False):
        if activation is None:
            activation = lambda v: jnp.maximum(v, 0.0)       # F.relu
        self.activation = activation
        out_feats, in_feats = W.shape
        self.in_feats, self.out_feats = in_feats, out_feats
        self.out_dtype = out_dtype                           # e.g. jnp.bfloat16 to halve store traffic
        self.keep_padded = bool(keep_padded)

        self.single_buffer = _single_buffer_ok()
        self.vmem_limit = _vmem_limit_bytes()
        self.budget = int(self.vmem_limit * 0.85)            # leave compiler headroom

        w_dtype = jnp.dtype(compute_dtype) if compute_dtype is not None else jnp.dtype(W.dtype)
        self.tile_k, self.tile_o, self.out_cols = _plan_weight_tiles(
            in_feats, out_feats, w_dtype.itemsize, self.budget,
            bool(pad_output_lanes), self.single_buffer)

        # ---- one-off parameter prep (hoisted out of the per-call path) ----
        w_t = W.T                                            # (in_feats, out_feats)
        b_p = b
        if self.out_cols != out_feats:
            w_t = jnp.pad(w_t, ((0, 0), (0, self.out_cols - out_feats)))
            b_p = jnp.pad(b, (0, self.out_cols - out_feats))
        self.w = jnp.asarray(w_t, dtype=w_dtype)
        self.b = jnp.asarray(b_p, dtype=jnp.float32).reshape(1, self.out_cols)

    def forward(self, h):
        out_dtype = jnp.dtype(self.out_dtype) if self.out_dtype is not None else h.dtype
        return _node_apply_fwd(
            h, self.w, self.b,
            activation=self.activation,
            out_dtype=out_dtype,
            tile_k=self.tile_k, tile_o=self.tile_o, out_feats=self.out_feats,
            keep_padded=self.keep_padded, single_buffer=self.single_buffer,
            vmem_limit=self.vmem_limit, budget=self.budget)

    def __call__(self, node):
        # Mirrors the PyTorch module: forward(node) -> {'h': act(linear(node.data['h']))}.
        if isinstance(node, dict):
            return {"h": self.forward(node["h"])}
        return self.forward(node)


if __name__ == "__main__":
    # Small GCN-layer shapes.
    N, in_feats, out_feats = 128, 64, 32

    key = jax.random.PRNGKey(0)
    kx, kw, kb = jax.random.split(key, 3)

    # nn.Linear-style init: uniform(-1/sqrt(in_feats), 1/sqrt(in_feats)).
    bound = float(in_feats) ** -0.5
    W = jax.random.uniform(kw, (out_feats, in_feats), jnp.float32, -bound, bound)
    b = jax.random.uniform(kb, (out_feats,), jnp.float32, -bound, bound)

    # node.data['h'] (node feature tensor)
    h = jax.random.normal(kx, (N, in_feats), jnp.float32)
    node = {"h": h}

    ref = jnp.maximum(h @ W.T + b, 0.0)

    # 1) Exact f32 path, exact-width output (no pad / slice HBM passes).
    layer = NodeApplyModule(W, b)
    out = layer(node)["h"]
    jax.block_until_ready(out)
    assert out.shape == (N, out_feats)
    assert jnp.allclose(out, ref, atol=1e-5, rtol=1e-5), "f32 mismatch vs reference"

    # 2) Lane-dense padded output handed downstream un-sliced (slice only to verify).
    layer_pad = NodeApplyModule(W, b, pad_output_lanes=True, keep_padded=True)
    out_pad = layer_pad(h)
    jax.block_until_ready(out_pad)
    assert out_pad.shape[0] == N and out_pad.shape[1] % 128 == 0
    assert jnp.allclose(out_pad[:, :out_feats], ref, atol=1e-5, rtol=1e-5), "padded mismatch"
    assert bool(jnp.all(out_pad[:, out_feats:] == 0.0)), "padding not zero"

    # 3) bf16 MXU-streaming weights (v6e/v7x): x stays f32 in HBM, cast in-kernel.
    layer_bf16 = NodeApplyModule(W, b, compute_dtype=jnp.bfloat16)
    out_bf16 = layer_bf16(h)
    jax.block_until_ready(out_bf16)
    assert out_bf16.shape == (N, out_feats)
    assert jnp.allclose(out_bf16, ref, atol=3e-2, rtol=3e-2), "bf16 mismatch vs reference"

    print("KERNEL_OK")
</pallas_src>

<mosaic_0001>
module attributes {stable_mosaic.version = 11 : i64} {
  func.func @_probe_kernel(%arg0: i32, %arg1: memref<8x128xf32, #tpu.memory_space<vmem>>, %arg2: memref<8x128xf32, #tpu.memory_space<vmem>>) attributes {dimension_semantics = [#tpu.dimension_semantics<arbitrary>], iteration_bounds = array<i64: 2>, scalar_prefetch = 0 : i64, scratch_operands = 0 : i64, tpu.core_type = #tpu.core_type<tc>, window_params = [{pipeline_mode = #tpu.pipeline_mode<synchronous>, transform_indices = @transform_0, window_bounds = array<i64: 8, 128>}, {pipeline_mode = #tpu.pipeline_mode<synchronous>, transform_indices = @transform_1, window_bounds = array<i64: 8, 128>}]} {
    %c0 = arith.constant 0 : index
    %c0_0 = arith.constant 0 : index
    %0 = vector.load %arg1[%c0, %c0_0] : memref<8x128xf32, #tpu.memory_space<vmem>>, vector<8x128xf32>
    %cst = arith.constant 1.000000e+00 : f32
    %1 = vector.broadcast %cst : f32 to vector<8x128xf32>
    %2 = arith.addf %0, %1 : vector<8x128xf32>
    %c0_1 = arith.constant 0 : index
    %c0_2 = arith.constant 0 : index
    %3 = vector.load %arg2[%c0_1, %c0_2] : memref<8x128xf32, #tpu.memory_space<vmem>>, vector<8x128xf32>
    tpu.vector_store %arg2[%c0_1, %c0_2], %2 {strides = array<i32>} : memref<8x128xf32, #tpu.memory_space<vmem>>, vector<8x128xf32>,
    return
  }
  func.func @transform_0(%arg0: i32) -> (i32, i32) {
    %c0_i32 = arith.constant 0 : i32
    %c0_i32_0 = arith.constant 0 : i32
    %c0_i32_1 = arith.constant 0 : i32
    return %c0_i32, %c0_i32_0 : i32, i32
  }
  func.func @transform_1(%arg0: i32) -> (i32, i32) {
    %c0_i32 = arith.constant 0 : i32
    %c0_i32_0 = arith.constant 0 : i32
    %c0_i32_1 = arith.constant 0 : i32
    return %c0_i32, %c0_i32_0 : i32, i32
  }
}

module attributes {stable_mosaic.version = 11 : i64} {
  func.func @_node_apply_kernel(%arg0: i32, %arg1: i32, %arg2: memref<64x64xf32, #tpu.memory_space<vmem>>, %arg3: memref<64x32xf32, #tpu.memory_space<vmem>>, %arg4: memref<1x32xf32, #tpu.memory_space<vmem>>, %arg5: memref<64x32xf32, #tpu.memory_space<vmem>>) attributes {dimension_semantics = [#tpu.dimension_semantics<parallel>, #tpu.dimension_semantics<parallel>], iteration_bounds = array<i64: 2, 1>, scalar_prefetch = 0 : i64, scratch_operands = 0 : i64, tpu.core_type = #tpu.core_type<tc>, window_params = [{transform_indices = @transform_0, window_bounds = array<i64: 64, 64>}, {transform_indices = @transform_1, window_bounds = array<i64: 64, 32>}, {transform_indices = @transform_2, window_bounds = array<i64: 1, 32>}, {transform_indices = @transform_3, window_bounds = array<i64: 64, 32>}]} {
    %c0 = arith.constant 0 : index
    %c0_0 = arith.constant 0 : index
    %0 = vector.load %arg2[%c0, %c0_0] : memref<64x64xf32, #tpu.memory_space<vmem>>, vector<64x64xf32>
    %c0_1 = arith.constant 0 : index
    %c0_2 = arith.constant 0 : index
    %1 = vector.load %arg3[%c0_1, %c0_2] : memref<64x32xf32, #tpu.memory_space<vmem>>, vector<64x32xf32>
    %cst = arith.constant dense<0.000000e+00> : vector<64x32xf32>
    %2 = tpu.matmul %0, %1, %cst {dimension_numbers = #tpu.dot_dimension_numbers<[1], [0], [0], [1], [0, 0, 1, 1], [], []>} : vector<64x64xf32>, vector<64x32xf32>, vector<64x32xf32> -> vector<64x32xf32>
    %c0_3 = arith.constant 0 : index
    %c0_4 = arith.constant 0 : index
    %3 = vector.load %arg4[%c0_3, %c0_4] : memref<1x32xf32, #tpu.memory_space<vmem>>, vector<1x32xf32>
    %4 = vector.broadcast %3 : vector<1x32xf32> to vector<64x32xf32>
    %5 = arith.addf %2, %4 : vector<64x32xf32>
    %cst_5 = arith.constant 0.000000e+00 : f32
    %6 = vector.broadcast %cst_5 : f32 to vector<64x32xf32>
    %7 = arith.maximumf %5, %6 : vector<64x32xf32>
    %c0_6 = arith.constant 0 : index
    %c0_7 = arith.constant 0 : index
    %8 = vector.load %arg5[%c0_6, %c0_7] : memref<64x32xf32, #tpu.memory_space<vmem>>, vector<64x32xf32>
    tpu.vector_store %arg5[%c0_6, %c0_7], %7 {strides = array<i32>} : memref<64x32xf32, #tpu.memory_space<vmem>>, vector<64x32xf32>,
    return
  }
  func.func @transform_0(%arg0: i32, %arg1: i32) -> (i32, i32) {
    %c0_i32 = arith.constant 0 : i32
    %c0_i32_0 = arith.constant 0 : i32
    return %arg0, %c0_i32 : i32, i32
  }
  func.func @transform_1(%arg0: i32, %arg1: i32) -> (i32, i32) {
    %c0_i32 = arith.constant 0 : i32
    %c0_i32_0 = arith.constant 0 : i32
    return %c0_i32, %arg1 : i32, i32
  }
  func.func @transform_2(%arg0: i32, %arg1: i32) -> (i32, i32) {
    %c0_i32 = arith.constant 0 : i32
    %c0_i32_0 = arith.constant 0 : i32
    return %c0_i32, %arg1 : i32, i32
  }
  func.func @transform_3(%arg0: i32, %arg1: i32) -> (i32, i32) {
    %c0_i32 = arith.constant 0 : i32
    return %arg0, %arg1 : i32, i32
  }
}

</mosaic_0001>

<llo_original>
// kernel: tpu_custom_call.1
$region0: #{tpu_custom_call.1}
  #allocation0 [shape = 'u32[]', space=smem, size = 0x4, offset = 0x4, fixed_abs, tag = 'smem constant byte address 0x4 - core index']
  #allocation1 [shape = 'u32[72,128]{1,0:T(1,128)}', space=vmem, size = 0x9000, scoped, tag = 'internal scratch']
  %s0 = inlined_call_operand.hbm [shape: f32[8,128], index: 0, kind: input, shape index: {}]
  %s1 = inlined_call_operand.hbm [shape: f32[8,128], index: 1, kind: output, shape index: {}]
  %s2 = sld [smem:[#allocation0]]
  $region41: #{tpu_custom_call.1} parent=0
    _
  %s4 = ssub.s32 1, %s2
  %s5 = scalar_select 0, %s4, %s2
  $region1: #{tpu_custom_call.1} parent=0
    #allocation2 [shape = 'u8[4096]{0}', space=vmem, size = 0x1000, scoped, tag = 'input window, operand 0, single buffered']
    #allocation3 [shape = 's32[2]{0}', space=sflag, size = 0x8, scoped, tag = 'scoped memory for tpu_custom_call.1']
    #allocation4 [shape = 's32[2]{0}', space=sflag, size = 0x8, scoped, tag = 'scoped memory for tpu_custom_call.1']
    #allocation5 [shape = 'u8[4096]{0}', space=vmem, size = 0x1000, scoped, tag = 'output window, operand 0, single buffered']
    %6 = vsyncpa [#allocation3], 0
    %7 = vsyncpa [#allocation4], 0
    loop: start=0, step=1, limit=4
    $region2: #{tpu_custom_call.1} parent=1 // loop_pre_header
      _
    $region3: #{tpu_custom_call.1} parent=1 // loop_header
      %s9 = sphi 0, %s13
      %p10 = scmp.ge.s32.totalorder %s9, 4
      %s17 = sphi 0, %s17
      %s19 = sphi 0, %s17
      %s20 = sphi 0, %s19
      %s34 = sphi 0, %s20
      %s38 = sphi 0, %s38
      %s40 = sphi 0, %s38
      %s41 = sphi 0, %s40
      %s55 = sphi 0, %s41
    $region4: #{tpu_custom_call.1} parent=1 // loop_header_branch
      %12 = sbr.rel (%p10) target = $region8
    $region5: #{tpu_custom_call.1} parent=1 // loop_body
      %s14 = ssub.s32 %s9, 1
      %s15 = ssub.s32 %s9, 2
      %s16 = sadd.s32 %s9, 1
      %s18 = sadd.s32 %s17, 1
      %p21 = scmp.eq.s32.totalorder %s9, 1
      %p22 = scmp.ne.s32.totalorder %s17, %s19
      %p23 = scmp.eq.s32.totalorder %s9, 0
      %p24 = por %p22, %p23
      %p25 = scmp.ne.s32.totalorder %s17, %s19
      %p26 = scmp.eq.s32.totalorder %s14, 1
      %p27 = por %p25, %p26
      %p28 = scmp.ne.s32.totalorder %s19, %s20
      %p29 = scmp.eq.s32.totalorder %s14, 0
      %p30 = por %p28, %p29
      %p31 = scmp.ne.s32.totalorder %s19, %s20
      %p32 = scmp.eq.s32.totalorder %s15, 1
      %p33 = por %p31, %p32
      %p35 = scmp.ne.s32.totalorder %s20, %s34
      %p36 = scmp.eq.s32.totalorder %s15, 0
      %p37 = por %p35, %p36
      %s39 = sadd.s32 %s38, 1
      %p42 = scmp.eq.s32.totalorder %s9, 1
      %p43 = scmp.ne.s32.totalorder %s38, %s40
      %p44 = scmp.eq.s32.totalorder %s9, 0
      %p45 = por %p43, %p44
      %p46 = scmp.ne.s32.totalorder %s38, %s40
      %p47 = scmp.eq.s32.totalorder %s14, 1
      %p48 = por %p46, %p47
      %p49 = scmp.ne.s32.totalorder %s40, %s41
      %p50 = scmp.eq.s32.totalorder %s14, 0
      %p51 = por %p49, %p50
      %p52 = scmp.ne.s32.totalorder %s40, %s41
      %p53 = scmp.eq.s32.totalorder %s15, 1
      %p54 = por %p52, %p53
      %p56 = scmp.ne.s32.totalorder %s41, %s55
      %p57 = scmp.eq.s32.totalorder %s15, 0
      %p58 = por %p56, %p57
      %p59 = scmp.le.s32.totalorder 1, %s9
      %p60 = scmp.lt.s32.totalorder %s9, 3
      %p61 = pnand %p59, %p60
      %p62 = pneg %p61
      // Predicated region
      $region9: #{tpu_custom_call.1} parent=5 // pred_check
        _
      $region10: #{tpu_custom_call.1} parent=5 // pred_check_branch
        %64 = sbr.rel (%p61) target = $region12
      $region11: #{tpu_custom_call.1} parent=5 // pred_region
        %s65 = ssub.s32 %s9, 1
        // Predicated region
        $region13: #{tpu_custom_call.1} parent=11 // pred_check
          %p66 = pneg %p30
        $region14: #{tpu_custom_call.1} parent=11 // pred_check_branch
          %68 = sbr.rel (%p66) target = $region16
        $region15: #{tpu_custom_call.1} parent=11 // pred_region
          %70 = vsyncadd [#allocation3], 0
          %s72 = sshll.u32 %s0, 4
          %s73 = int_to_ptr.hbm [resolvable:$true] %s72
          %s74 = sshll.u32 [#allocation2], 4
          %s75 = int_to_ptr.vmem [resolvable:$true] %s74
          %77 = dma.hbm_to_vmem [thread:$0]  %s73, 128, %s75, [#allocation3]
        $region16: #{tpu_custom_call.1} parent=11 // pred_fallthru
          _
      $region12: #{tpu_custom_call.1} parent=5 // pred_fallthru
        _
      %p78 = scmp.lt.s32.totalorder %s9, 2
      // Predicated region
      $region17: #{tpu_custom_call.1} parent=5 // pred_check
        %p79 = pneg %p78
      $region18: #{tpu_custom_call.1} parent=5 // pred_check_branch
        %81 = sbr.rel (%p79) target = $region20
      $region19: #{tpu_custom_call.1} parent=5 // pred_region
        _
      $region20: #{tpu_custom_call.1} parent=5 // pred_fallthru
        _
      %p82 = scmp.le.s32.totalorder 1, %s9
      %p83 = scmp.lt.s32.totalorder %s9, 3
      %p84 = pnand %p82, %p83
      %p85 = pneg %p84
      // Predicated region
      $region21: #{tpu_custom_call.1} parent=5 // pred_check
        _
      $region22: #{tpu_custom_call.1} parent=5 // pred_check_branch
        %87 = sbr.rel (%p84) target = $region24
      $region23: #{tpu_custom_call.1} parent=5 // pred_region
        %s88 = ssub.s32 %s9, 1
        // Predicated region
        $region25: #{tpu_custom_call.1} parent=23 // pred_check
          %p89 = pneg %p30
        $region26: #{tpu_custom_call.1} parent=23 // pred_check_branch
          %91 = sbr.rel (%p89) target = $region28
        $region27: #{tpu_custom_call.1} parent=23 // pred_region
          %93 = dma.done [#allocation3], 128
        $region28: #{tpu_custom_call.1} parent=23 // pred_fallthru
          _
        %p94 = pneg %p30
        %p95 = pneg %p27
        %p96 = pneg %p51
        %p97 = pneg %p48
        %v98 = vld [vmem:[#allocation2] sm:$0xff]
        %v99 = vadd.f32 %v98, 1.0
        %100 = vst [vmem:[#allocation5] sm:$0xff] %v99
        // Predicated region
        $region29: #{tpu_custom_call.1} parent=23 // pred_check
          %p101 = pneg %p48
        $region30: #{tpu_custom_call.1} parent=23 // pred_check_branch
          %103 = sbr.rel (%p101) target = $region32
        $region31: #{tpu_custom_call.1} parent=23 // pred_region
          %105 = vsyncadd [#allocation4], 0
          %s107 = sshll.u32 [#allocation5], 4
          %s108 = int_to_ptr.vmem [resolvable:$true] %s107
          %s109 = sshll.u32 %s1, 4
          %s110 = int_to_ptr.hbm [resolvable:$true] %s109
          %112 = dma.vmem_to_hbm [thread:$0]  %s108, 128, %s110, [#allocation4]
        $region32: #{tpu_custom_call.1} parent=23 // pred_fallthru
          _
        // Predicated region
        $region33: #{tpu_custom_call.1} parent=23 // pred_check
          %p113 = pneg %p48
        $region34: #{tpu_custom_call.1} parent=23 // pred_check_branch
          %115 = sbr.rel (%p113) target = $region36
        $region35: #{tpu_custom_call.1} parent=23 // pred_region
          %117 = dma.done [#allocation4], 128
        $region36: #{tpu_custom_call.1} parent=23 // pred_fallthru
          _
      $region24: #{tpu_custom_call.1} parent=5 // pred_fallthru
        _
      %p118 = scmp.le.s32.totalorder 2, %s9
      // Predicated region
      $region37: #{tpu_custom_call.1} parent=5 // pred_check
        %p119 = pneg %p118
      $region38: #{tpu_custom_call.1} parent=5 // pred_check_branch
        %121 = sbr.rel (%p119) target = $region40
      $region39: #{tpu_custom_call.1} parent=5 // pred_region
        %s122 = ssub.s32 %s9, 2
      $region40: #{tpu_custom_call.1} parent=5 // pred_fallthru
        _
    $region6: #{tpu_custom_call.1} parent=1 // loop_footer
      %s13 = sadd.s32 1, %s9
    $region7: #{tpu_custom_call.1} parent=1 // loop_footer_branch
      %8 = sbr.rel target = $region3
    $region8: #{tpu_custom_call.1} parent=1 // loop_exit
      _
    %123 = vsyncpa [#allocation3], 1
    %s124 = scalar_lea.sflag [#allocation3], 1
    %125 = vsyncpa %s124, 1
    %126 = vsyncpa [#allocation4], 1
    %s127 = scalar_lea.sflag [#allocation4], 1
    %128 = vsyncpa %s127, 1

// kernel: _node_apply_fwd.1
$region0: #{_node_apply_fwd.1}
  #allocation0 [shape = 'u32[]', space=smem, size = 0x4, offset = 0x4, fixed_abs, tag = 'smem constant byte address 0x4 - core index']
  #allocation1 [shape = 'u32[72,128]{1,0:T(1,128)}', space=vmem, size = 0x9000, scoped, tag = 'internal scratch']
  %s0 = inlined_call_operand.vmem [shape: f32[128,64], index: 0, kind: input, shape index: {}]
  %s1 = inlined_call_operand.vmem [shape: f32[64,32], index: 1, kind: input, shape index: {}]
  %s2 = inlined_call_operand.vmem [shape: f32[1,32], index: 2, kind: input, shape index: {}]
  %s3 = inlined_call_operand.vmem [shape: f32[128,32], index: 3, kind: output, shape index: {}]
  %s4 = sld [smem:[#allocation0]]
  $region45: #{_node_apply_fwd.1} parent=0
    _
  %s6 = ssub.s32 1, %s4
  %s7 = scalar_select 0, %s6, %s4
  loop: start=0, step=1, limit=4
  $region2: #{_node_apply_fwd.1} parent=0 // loop_pre_header
    _
  $region3: #{_node_apply_fwd.1} parent=0 // loop_header
    %s9 = sphi 0, %s13
    %p10 = scmp.ge.s32.totalorder %s9, 4
    %s16 = sphi 0, %s28
    %s17 = sphi 0, %s24
    %s18 = sphi 0, %s16
    %s19 = sphi 0, %s17
    %s20 = sphi 0, %s18
    %s21 = sphi 0, %s19
    %s31 = sphi 0, %s33
    %s34 = sphi 0, %s31
    %s35 = sphi 0, %s34
    %s51 = sphi 0, %s35
    %s57 = sphi 0, %s59
    %s60 = sphi 0, %s57
    %s61 = sphi 0, %s60
    %s77 = sphi 0, %s61
    %s83 = sphi 0, %s85
    %s86 = sphi 0, %s83
    %s87 = sphi 0, %s86
    %s103 = sphi 0, %s87
    %s111 = sphi 0, %s113
    %s114 = sphi 0, %s111
    %s115 = sphi 0, %s114
    %s131 = sphi 0, %s115
  $region4: #{_node_apply_fwd.1} parent=0 // loop_header_branch
    %12 = sbr.rel (%p10) target = $region8
  $region5: #{_node_apply_fwd.1} parent=0 // loop_body
    %s14 = ssub.s32 %s9, 1
    %s15 = ssub.s32 %s9, 2
    %s22 = sadd.s32 1, %s17
    %p23 = scmp.ge.s32.totalorder %s22, 1
    %s24 = scalar_select %p23, 0, %s22
    %s25 = sadd.s32 1, %s16
    %s26 = scalar_select %p23, %s25, %s16
    %p27 = scmp.ge.s32.totalorder %s26, 2
    %s28 = scalar_select %p27, 0, %s26
    %s29 = ssub.s32 %s16, %s28
    %p30 = scmp.eq.s32.totalorder %s29, 0
    %s32 = sadd.s32 %s31, 1
    %s33 = scalar_select %p30, %s31, %s32
    %p36 = pneg %p30
    %p37 = scmp.eq.s32.totalorder %s9, 1
    %p38 = por %p36, %p37
    %p39 = scmp.ne.s32.totalorder %s31, %s34
    %p40 = scmp.eq.s32.totalorder %s9, 0
    %p41 = por %p39, %p40
    %p42 = scmp.ne.s32.totalorder %s31, %s34
    %p43 = scmp.eq.s32.totalorder %s14, 1
    %p44 = por %p42, %p43
    %p45 = scmp.ne.s32.totalorder %s34, %s35
    %p46 = scmp.eq.s32.totalorder %s14, 0
    %p47 = por %p45, %p46
    %p48 = scmp.ne.s32.totalorder %s34, %s35
    %p49 = scmp.eq.s32.totalorder %s15, 1
    %p50 = por %p48, %p49
    %p52 = scmp.ne.s32.totalorder %s35, %s51
    %p53 = scmp.eq.s32.totalorder %s15, 0
    %p54 = por %p52, %p53
    %s55 = ssub.s32 %s17, %s24
    %p56 = scmp.eq.s32.totalorder %s55, 0
    %s58 = sadd.s32 %s57, 1
    %s59 = scalar_select %p56, %s57, %s58
    %p62 = pneg %p56
    %p63 = scmp.eq.s32.totalorder %s9, 1
    %p64 = por %p62, %p63
    %p65 = scmp.ne.s32.totalorder %s57, %s60
    %p66 = scmp.eq.s32.totalorder %s9, 0
    %p67 = por %p65, %p66
    %p68 = scmp.ne.s32.totalorder %s57, %s60
    %p69 = scmp.eq.s32.totalorder %s14, 1
    %p70 = por %p68, %p69
    %p71 = scmp.ne.s32.totalorder %s60, %s61
    %p72 = scmp.eq.s32.totalorder %s14, 0
    %p73 = por %p71, %p72
    %p74 = scmp.ne.s32.totalorder %s60, %s61
    %p75 = scmp.eq.s32.totalorder %s15, 1
    %p76 = por %p74, %p75
    %p78 = scmp.ne.s32.totalorder %s61, %s77
    %p79 = scmp.eq.s32.totalorder %s15, 0
    %p80 = por %p78, %p79
    %s81 = ssub.s32 %s17, %s24
    %p82 = scmp.eq.s32.totalorder %s81, 0
    %s84 = sadd.s32 %s83, 1
    %s85 = scalar_select %p82, %s83, %s84
    %p88 = pneg %p82
    %p89 = scmp.eq.s32.totalorder %s9, 1
    %p90 = por %p88, %p89
    %p91 = scmp.ne.s32.totalorder %s83, %s86
    %p92 = scmp.eq.s32.totalorder %s9, 0
    %p93 = por %p91, %p92
    %p94 = scmp.ne.s32.totalorder %s83, %s86
    %p95 = scmp.eq.s32.totalorder %s14, 1
    %p96 = por %p94, %p95
    %p97 = scmp.ne.s32.totalorder %s86, %s87
    %p98 = scmp.eq.s32.totalorder %s14, 0
    %p99 = por %p97, %p98
    %p100 = scmp.ne.s32.totalorder %s86, %s87
    %p101 = scmp.eq.s32.totalorder %s15, 1
    %p102 = por %p100, %p101
    %p104 = scmp.ne.s32.totalorder %s87, %s103
    %p105 = scmp.eq.s32.totalorder %s15, 0
    %p106 = por %p104, %p105
    %s107 = ssub.s32 %s16, %s28
    %s108 = ssub.s32 %s17, %s24
    %s109 = sor.u32 %s107, %s108
    %p110 = scmp.eq.s32.totalorder %s109, 0
    %s112 = sadd.s32 %s111, 1
    %s113 = scalar_select %p110, %s111, %s112
    %p116 = pneg %p110
    %p117 = scmp.eq.s32.totalorder %s9, 1
    %p118 = por %p116, %p117
    %p119 = scmp.ne.s32.totalorder %s111, %s114
    %p120 = scmp.eq.s32.totalorder %s9, 0
    %p121 = por %p119, %p120
    %p122 = scmp.ne.s32.totalorder %s111, %s114
    %p123 = scmp.eq.s32.totalorder %s14, 1
    %p124 = por %p122, %p123
    %p125 = scmp.ne.s32.totalorder %s114, %s115
    %p126 = scmp.eq.s32.totalorder %s14, 0
    %p127 = por %p125, %p126
    %p128 = scmp.ne.s32.totalorder %s114, %s115
    %p129 = scmp.eq.s32.totalorder %s15, 1
    %p130 = por %p128, %p129
    %p132 = scmp.ne.s32.totalorder %s115, %s131
    %p133 = scmp.eq.s32.totalorder %s15, 0
    %p134 = por %p132, %p133
    %p135 = scmp.le.s32.totalorder 1, %s9
    %p136 = scmp.lt.s32.totalorder %s9, 3
    %p137 = pnand %p135, %p136
    %p138 = pneg %p137
    // Predicated region
    $region9: #{_node_apply_fwd.1} parent=5 // pred_check
      _
    $region10: #{_node_apply_fwd.1} parent=5 // pred_check_branch
      %140 = sbr.rel (%p137) target = $region12
    $region11: #{_node_apply_fwd.1} parent=5 // pred_region
      %s141 = ssub.s32 %s9, 1
      // Predicated region
      $region13: #{_node_apply_fwd.1} parent=11 // pred_check
        %p142 = pneg %p73
      $region14: #{_node_apply_fwd.1} parent=11 // pred_check_branch
        %144 = sbr.rel (%p142) target = $region16
      $region15: #{_node_apply_fwd.1} parent=11 // pred_region
        %p145 = scmp.lt.s32.totalorder %s19, 0
        %s146 = scalar_select %p145, %s19, 0
        %s147 = smul.addr %s146, 8
        %s148 = scalar_lea.vmem %s1, %s147
      $region16: #{_node_apply_fwd.1} parent=11 // pred_fallthru
        _
      // Predicated region
      $region17: #{_node_apply_fwd.1} parent=11 // pred_check
        %p149 = pneg %p99
      $region18: #{_node_apply_fwd.1} parent=11 // pred_check_branch
        %151 = sbr.rel (%p149) target = $region20
      $region19: #{_node_apply_fwd.1} parent=11 // pred_region
        %p152 = scmp.lt.s32.totalorder %s19, 0
        %s153 = scalar_select %p152, %s19, 0
        %s154 = scalar_lea.vmem %s2, %s153
      $region20: #{_node_apply_fwd.1} parent=11 // pred_fallthru
        _
    $region12: #{_node_apply_fwd.1} parent=5 // pred_fallthru
      _
    %p155 = scmp.lt.s32.totalorder %s9, 2
    // Predicated region
    $region21: #{_node_apply_fwd.1} parent=5 // pred_check
      %p156 = pneg %p155
    $region22: #{_node_apply_fwd.1} parent=5 // pred_check_branch
      %158 = sbr.rel (%p156) target = $region24
    $region23: #{_node_apply_fwd.1} parent=5 // pred_region
      // Predicated region
      $region25: #{_node_apply_fwd.1} parent=23 // pred_check
        %p159 = pneg %p41
      $region26: #{_node_apply_fwd.1} parent=23 // pred_check_branch
        %161 = sbr.rel (%p159) target = $region28
      $region27: #{_node_apply_fwd.1} parent=23 // pred_region
        %s162 = smul.u32 8, %s16
        %p163 = scmp.lt.s32.totalorder %s162, 15
        %s164 = scalar_select %p163, %s162, 15
        %s165 = smul.addr %s164, 8
        %s166 = scalar_lea.vmem %s0, %s165
        %s167 = smul.u32 8, %s16
      $region28: #{_node_apply_fwd.1} parent=23 // pred_fallthru
        _
    $region24: #{_node_apply_fwd.1} parent=5 // pred_fallthru
      _
    %p168 = scmp.le.s32.totalorder 1, %s9
    %p169 = scmp.lt.s32.totalorder %s9, 3
    %p170 = pnand %p168, %p169
    %p171 = pneg %p170
    // Predicated region
    $region29: #{_node_apply_fwd.1} parent=5 // pred_check
      _
    $region30: #{_node_apply_fwd.1} parent=5 // pred_check_branch
      %173 = sbr.rel (%p170) target = $region32
    $region31: #{_node_apply_fwd.1} parent=5 // pred_region
      %s174 = ssub.s32 %s9, 1
      %s175 = smul.u32 8, %s18
      %p176 = scmp.lt.s32.totalorder %s175, 15
      %s177 = scalar_select %p176, %s175, 15
      %s178 = smul.addr %s177, 8
      %s179 = scalar_lea.vmem %s0, %s178
      %p180 = pneg %p47
      %p181 = pneg %p44
      %p182 = scmp.lt.s32.totalorder %s19, 0
      %s183 = scalar_select %p182, %s19, 0
      %s184 = smul.addr %s183, 8
      %s185 = scalar_lea.vmem %s1, %s184
      %p186 = pneg %p73
      %p187 = pneg %p70
      %p188 = scmp.lt.s32.totalorder %s19, 0
      %s189 = scalar_select %p188, %s19, 0
      %s190 = scalar_lea.vmem %s2, %s189
      %p191 = pneg %p99
      %p192 = pneg %p96
      %p193 = pneg %p127
      %p194 = pneg %p124
      %s195 = smul.u32 8, %s18
      %p196 = scmp.lt.s32.totalorder %s195, 15
      %s197 = scalar_select %p196, %s195, 15
      %p198 = scmp.lt.s32.totalorder %s19, 0
      %s199 = scalar_select %p198, %s19, 0
      %s200 = sadd.s32 %s199, %s197
      %s201 = smul.addr %s200, 8
      %s202 = scalar_lea.vmem %s3, %s201
      %s203 = smul.u32 8, %s18
      %p204 = scmp.lt.s32.totalorder %s203, 15
      %s205 = scalar_select %p204, %s203, 15
      %s206 = smul.addr %s205, 8
      %s207 = scalar_lea.vmem %s0, %s206
      %s208 = smul.u32 8, %s18
      %p209 = scmp.lt.s32.totalorder %s19, 0
      %s210 = scalar_select %p209, %s19, 0
      %s211 = smul.addr %s210, 8
      %s212 = scalar_lea.vmem %s1, %s211
      %p213 = scmp.lt.s32.totalorder %s19, 0
      %s214 = scalar_select %p213, %s19, 0
      %s215 = scalar_lea.vmem %s2, %s214
      %s216 = smul.u32 8, %s18
      %p217 = scmp.lt.s32.totalorder %s216, 15
      %s218 = scalar_select %p217, %s216, 15
      %p219 = scmp.lt.s32.totalorder %s19, 0
      %s220 = scalar_select %p219, %s19, 0
      %s221 = sadd.s32 %s220, %s218
      %s222 = smul.addr %s221, 8
      %s223 = scalar_lea.vmem %s3, %s222
      %s224 = smul.u32 8, %s18
      %v225 = vld [vmem:[%s207] sm:$0xff]
      %v226 = vld [vmem:[%s207 + $0x8] sm:$0xff]
      %v227 = vld [vmem:[%s207 + $0x10] sm:$0xff]
      %v228 = vld [vmem:[%s207 + $0x18] sm:$0xff]
      %v229 = vld [vmem:[%s207 + $0x20] sm:$0xff]
      %v230 = vld [vmem:[%s207 + $0x28] sm:$0xff]
      %v231 = vld [vmem:[%s207 + $0x30] sm:$0xff]
      %v232 = vld [vmem:[%s207 + $0x38] sm:$0xff]
      %v233 = vld [vmem:[%s212] sm:$0xff]
      %v234 = vld [vmem:[%s212 + $0x8] sm:$0xff]
      %v235 = vld [vmem:[%s212 + $0x10] sm:$0xff]
      %v236 = vld [vmem:[%s212 + $0x18] sm:$0xff]
      %v237 = vld [vmem:[%s212 + $0x20] sm:$0xff]
      %v238 = vld [vmem:[%s212 + $0x28] sm:$0xff]
      %v239 = vld [vmem:[%s212 + $0x30] sm:$0xff]
      %v240 = vld [vmem:[%s212 + $0x38] sm:$0xff]
      %v241 = vld [vmem:[%s215] sm:$0x1]
      %v243 = vperm.slane %v241, 0
      %vm245 = vcmask 523264
      %v247 = vsel %vm245, %v225, 0
      %v250 = vsel %vm245, %v226, 0
      %v253 = vsel %vm245, %v227, 0
      %v256 = vsel %vm245, %v228, 0
      %v259 = vsel %vm245, %v229, 0
      %v262 = vsel %vm245, %v230, 0
      %v265 = vsel %vm245, %v231, 0
      %v268 = vsel %vm245, %v232, 0
      %270 = vmatpush.msra.mxu0 0.0
      %271 = vmatpush.msra.mxu0 0.0
      %272 = vmatpush.msra.mxu0 0.0
      %273 = vmatpush.msra.mxu0 0.0
      %274 = vmatpush.msra.mxu0 0.0
      %275 = vmatpush.msra.mxu0 0.0
      %276 = vmatpush.msra.mxu0 0.0
      %277 = vmatpush.msra.mxu0 0.0
      %278 = vmatpush.msra.mxu0 %v240
      %279 = vmatpush.msra.mxu0 %v239
      %280 = vmatpush.msra.mxu0 %v238
      %281 = vmatpush.msra.mxu0 %v237
      %282 = vmatpush.msra.mxu0 %v236
      %283 = vmatpush.msra.mxu0 %v235
      %284 = vmatpush.msra.mxu0 %v234
      %285 = vmatpush.msra.mxu0 %v233
      %286 = vmatmul.f32.gmra.mxu0 %v247
      %v287 = vpop.f32.mrf.mxu0
      %v288 = vadd.f32 %v243, %v287
      %289 = vmatmul.f32.gmra.mxu0 %v250
      %v290 = vpop.f32.mrf.mxu0
      %v291 = vadd.f32 %v243, %v290
      %292 = vmatmul.f32.gmra.mxu0 %v253
      %v293 = vpop.f32.mrf.mxu0
      %v294 = vadd.f32 %v243, %v293
      %295 = vmatmul.f32.gmra.mxu0 %v256
      %v296 = vpop.f32.mrf.mxu0
      %v297 = vadd.f32 %v243, %v296
      %298 = vmatmul.f32.gmra.mxu0 %v259
      %v299 = vpop.f32.mrf.mxu0
      %v300 = vadd.f32 %v243, %v299
      %301 = vmatmul.f32.gmra.mxu0 %v262
      %v302 = vpop.f32.mrf.mxu0
      %v303 = vadd.f32 %v243, %v302
      %304 = vmatmul.f32.gmra.mxu0 %v265
      %v305 = vpop.f32.mrf.mxu0
      %v306 = vadd.f32 %v243, %v305
      %307 = vmatmul.f32.gmra.mxu0 %v268
      %v308 = vpop.f32.mrf.mxu0
      %v309 = vadd.f32 %v243, %v308
      %310 = vdwg.mxu0
      %v311 = vmax.f32 %v288, 0.0
      %v312 = vmax.f32 %v291, 0.0
      %v313 = vmax.f32 %v294, 0.0
      %v314 = vmax.f32 %v297, 0.0
      %v315 = vmax.f32 %v300, 0.0
      %v316 = vmax.f32 %v303, 0.0
      %v317 = vmax.f32 %v306, 0.0
      %v318 = vmax.f32 %v309, 0.0
      %vm319 = vcmask 261120
      %320 = vst.msk [vmem:[%s223] sm:$0xff] %vm319, %v311
      %321 = vst.msk [vmem:[%s223 + $0x8] sm:$0xff] %vm319, %v312
      %322 = vst.msk [vmem:[%s223 + $0x10] sm:$0xff] %vm319, %v313
      %323 = vst.msk [vmem:[%s223 + $0x18] sm:$0xff] %vm319, %v314
      %324 = vst.msk [vmem:[%s223 + $0x20] sm:$0xff] %vm319, %v315
      %325 = vst.msk [vmem:[%s223 + $0x28] sm:$0xff] %vm319, %v316
      %326 = vst.msk [vmem:[%s223 + $0x30] sm:$0xff] %vm319, %v317
      %327 = vst.msk [vmem:[%s223 + $0x38] sm:$0xff] %vm319, %v318
      %s328 = smul.u32 8, %s18
      %p329 = scmp.lt.s32.totalorder %s328, 15
      %s330 = scalar_select %p329, %s328, 15
      %p331 = scmp.lt.s32.totalorder %s19, 0
      %s332 = scalar_select %p331, %s19, 0
      %s333 = sadd.s32 %s332, %s330
      %s334 = smul.addr %s333, 8
      %s335 = scalar_lea.vmem %s3, %s334
      // Predicated region
      $region33: #{_node_apply_fwd.1} parent=31 // pred_check
        %p336 = pneg %p124
      $region34: #{_node_apply_fwd.1} parent=31 // pred_check_branch
        %338 = sbr.rel (%p336) target = $region36
      $region35: #{_node_apply_fwd.1} parent=31 // pred_region
        %s339 = smul.u32 8, %s18
      $region36: #{_node_apply_fwd.1} parent=31 // pred_fallthru
        _
    $region32: #{_node_apply_fwd.1} parent=5 // pred_fallthru
      _
    %p340 = scmp.le.s32.totalorder 2, %s9
    // Predicated region
    $region37: #{_node_apply_fwd.1} parent=5 // pred_check
      %p341 = pneg %p340
    $region38: #{_node_apply_fwd.1} parent=5 // pred_check_branch
      %343 = sbr.rel (%p341) target = $region40
    $region39: #{_node_apply_fwd.1} parent=5 // pred_region
      %s344 = ssub.s32 %s9, 2
      // Predicated region
      $region41: #{_node_apply_fwd.1} parent=39 // pred_check
        %p345 = pneg %p130
      $region42: #{_node_apply_fwd.1} parent=39 // pred_check_branch
        %347 = sbr.rel (%p345) target = $region44
      $region43: #{_node_apply_fwd.1} parent=39 // pred_region
        %s348 = smul.u32 8, %s20
        %p349 = scmp.lt.s32.totalorder %s348, 15
        %s350 = scalar_select %p349, %s348, 15
        %p351 = scmp.lt.s32.totalorder %s21, 0
        %s352 = scalar_select %p351, %s21, 0
        %s353 = sadd.s32 %s352, %s350
        %s354 = smul.addr %s353, 8
        %s355 = scalar_lea.vmem %s3, %s354
      $region44: #{_node_apply_fwd.1} parent=39 // pred_fallthru
        _
    $region40: #{_node_apply_fwd.1} parent=5 // pred_fallthru
      _
  $region6: #{_node_apply_fwd.1} parent=0 // loop_footer
    %s13 = sadd.s32 1, %s9
  $region7: #{_node_apply_fwd.1} parent=0 // loop_footer_branch
    %8 = sbr.rel target = $region3
  $region8: #{_node_apply_fwd.1} parent=0 // loop_exit
    _

</llo_original>
